<compile_context>
chip_gen: v7x
topology: tpu7x:2x2x1
jax: 0.10.0
libtpu: 0.0.40
codegen_flags: <defaults>
</compile_context>

<pallas_src>
import jax
import jax.numpy as jnp
from jax.experimental import pallas as pl
from jax.experimental.pallas import tpu as pltpu

_MAX_BATCH_PACK = 8        # cap on batch rows per block (bounds the epilogue unroll)


def _cdiv(a, b):
    return -(-a // b)


def _vmem_capacity_bytes():
    try:
        return int(pltpu.get_tpu_info().vmem_capacity_bytes)
    except Exception:
        return 64 * 1024 * 1024          # conservative (v7x-sized) fallback


def channel_attention(x, w1, w2, *, vmem_tile_budget_bytes=None):
    """x: (B, C, H, W); w1: (C//r, C) fc1 weight; w2: (C, C//r) fc2 weight.

    Returns sigmoid channel attention of shape (B, C, 1, 1) (float32).
    """
    B, C, H, W = x.shape
    Cr = w1.shape[0]
    HW = H * W
    x_flat = x.reshape(B, C, HW)
    w2t = w2.T                            # (Cr, C): final matmul contracts Cr

    itemsize = jnp.dtype(x.dtype).itemsize
    vmem_cap = _vmem_capacity_bytes()
    if vmem_tile_budget_bytes is None:
        # Budget for the double-buffered input slab (counts both pipeline buffers).
        vmem_tile_budget_bytes = min(vmem_cap // 3, 24 * 1024 * 1024)
    budget = max(int(vmem_tile_budget_bytes), 2 * C * 128 * itemsize)

    # ---- choose batch packing (bt) and spatial tiling (hw_tile, K) ----
    bytes_row_full = 2 * C * HW * itemsize     # one batch row, full HW, double-buffered
    if bytes_row_full <= budget:
        # Small spatial extent: whole H*W fits in one tile; pack batch rows.
        max_bt = min(B, _MAX_BATCH_PACK, max(1, budget // bytes_row_full))
        bt = max(d for d in range(1, max_bt + 1) if B % d == 0)
        hw_tile, K = HW, 1
    else:
        # Large spatial extent: stream balanced, 128-aligned spatial tiles.
        bt = 1
        max_lanes = max(128, budget // (2 * C * itemsize))
        n_tiles = _cdiv(HW, max_lanes)
        hw_tile = _cdiv(_cdiv(HW, n_tiles), 128) * 128
        if hw_tile >= HW:
            hw_tile = HW
        K = _cdiv(HW, hw_tile)
    needs_mask = (HW % hw_tile) != 0           # only the last spatial tile is ragged

    vmem_limit_bytes = int(min(max(budget + (16 << 20), 32 << 20),
                               max(vmem_cap - (8 << 20), 32 << 20)))
    inv_hw = 1.0 / HW

    def kernel(x_ref, w1_ref, w2t_ref, o_ref, sum_acc, max_acc):
        # x_ref : (bt, C, hw_tile)   w1_ref: (Cr, C)   w2t_ref: (Cr, C)
        # o_ref : (bt, C)            sum_acc/max_acc: (bt, C, 1) f32 VMEM scratch
        k = pl.program_id(1)

        @pl.when(k == 0)
        def _init():
            sum_acc[...] = jnp.zeros_like(sum_acc)
            max_acc[...] = jnp.full_like(max_acc, -jnp.inf)

        xt_in = x_ref[...]                         # input dtype (f32 or bf16)
        xt = xt_in.astype(jnp.float32)             # widened only for the sum path

        def accumulate_full():                     # unmasked fast path
            sum_acc[...] += jnp.sum(xt, axis=-1, keepdims=True)
            # max is exact in the input dtype; widen only the (bt, C, 1) result.
            max_acc[...] = jnp.maximum(
                max_acc[...],
                jnp.max(xt_in, axis=-1, keepdims=True).astype(jnp.float32))

        def accumulate_masked_last():              # ragged last tile only
            lane = jax.lax.broadcasted_iota(jnp.int32, xt.shape, xt.ndim - 1)
            valid = (k * hw_tile + lane) < HW
            xs = jnp.where(valid, xt, 0.0)
            xm = jnp.where(valid, xt, -jnp.inf)
            sum_acc[...] += jnp.sum(xs, axis=-1, keepdims=True)
            max_acc[...] = jnp.maximum(
                max_acc[...], jnp.max(xm, axis=-1, keepdims=True))

        if needs_mask:
            pl.when(k < K - 1)(accumulate_full)
            pl.when(k == K - 1)(accumulate_masked_last)
        else:
            accumulate_full()

        @pl.when(k == K - 1)
        def _epilogue():
            for i in range(bt):                    # static unroll, bt <= _MAX_BATCH_PACK
                a_col = sum_acc[i] * inv_hw        # (C, 1) mean
                m_col = max_acc[i]                 # (C, 1) max
                # fc1 (+ReLU) per branch; fc2 is linear so branches sum after ReLU.
                h = jnp.maximum(
                    jnp.dot(w1_ref[...], a_col,
                            preferred_element_type=jnp.float32), 0.0)
                h = h + jnp.maximum(
                    jnp.dot(w1_ref[...], m_col,
                            preferred_element_type=jnp.float32), 0.0)      # (Cr, 1)
                # fc2 as a transposed contraction over Cr: (Cr,1) x (Cr,C) -> (1,C),
                # lane-dense row (replaces the eye-based transpose).
                y = jax.lax.dot_general(
                    h, w2t_ref[...], (((0,), (0,)), ((), ())),
                    preferred_element_type=jnp.float32)                    # (1, C)
                o_ref[pl.ds(i, 1), :] = jax.nn.sigmoid(y).astype(o_ref.dtype)

    bytes_accessed = (int(x_flat.size) * itemsize
                      + int(w1.size) * jnp.dtype(w1.dtype).itemsize
                      + int(w2t.size) * jnp.dtype(w2t.dtype).itemsize
                      + B * C * 4)
    cost = pl.CostEstimate(
        flops=2 * B * C * HW + B * (4 * Cr * C + 2 * Cr * C),
        transcendentals=B * C,
        bytes_accessed=bytes_accessed)

    out = pl.pallas_call(
        kernel,
        out_shape=jax.ShapeDtypeStruct((B, C), jnp.float32),
        grid_spec=pltpu.PrefetchScalarGridSpec(
            num_scalar_prefetch=0,
            grid=(B // bt, K),
            in_specs=[
                pl.BlockSpec((bt, C, hw_tile), lambda b, k: (b, 0, k)),
                pl.BlockSpec((Cr, C), lambda b, k: (0, 0)),
                pl.BlockSpec((Cr, C), lambda b, k: (0, 0)),
            ],
            out_specs=pl.BlockSpec((bt, C), lambda b, k: (b, 0)),
            scratch_shapes=[
                pltpu.VMEM((bt, C, 1), jnp.float32),   # running sum
                pltpu.VMEM((bt, C, 1), jnp.float32),   # running max
            ],
        ),
        compiler_params=pltpu.CompilerParams(
            dimension_semantics=("parallel", "arbitrary"),
            vmem_limit_bytes=vmem_limit_bytes),
        cost_estimate=cost,
    )(x_flat, w1, w2t)

    return out.reshape(B, C, 1, 1)


def reference(x, w1, w2):
    # Pure-JAX reference matching the PyTorch module.
    xf = x.astype(jnp.float32)
    avg = jnp.mean(xf, axis=(2, 3))                     # (B, C)
    mx = jnp.max(xf, axis=(2, 3))                       # (B, C)

    def branch(p):                                      # p: (B, C)
        h = jnp.maximum(p @ w1.T, 0.0)                  # (B, Cr)
        return h @ w2.T                                 # (B, C)

    out = jax.nn.sigmoid(branch(avg) + branch(mx))      # (B, C)
    return out[:, :, None, None]


if __name__ == "__main__":
    ratio = 8
    key = jax.random.PRNGKey(0)

    # Case 1: small shapes -> batch-packed path (bt = B = 2, K = 1).
    B, C, H, W = 2, 32, 16, 16
    Cr = C // ratio
    kx, k1, k2 = jax.random.split(key, 3)
    x = jax.random.normal(kx, (B, C, H, W), dtype=jnp.float32)
    # Conv2d(C, Cr, 1, bias=False).weight: (Cr, C, 1, 1) -> (Cr, C)
    w1 = jax.random.normal(k1, (Cr, C), dtype=jnp.float32) * 0.1
    # Conv2d(Cr, C, 1, bias=False).weight: (C, Cr, 1, 1) -> (C, Cr)
    w2 = jax.random.normal(k2, (C, Cr), dtype=jnp.float32) * 0.1

    out = jax.block_until_ready(channel_attention(x, w1, w2))
    ref = reference(x, w1, w2)
    assert out.shape == (B, C, 1, 1), out.shape
    assert jnp.allclose(out, ref, atol=1e-5, rtol=1e-5), \
        float(jnp.max(jnp.abs(out - ref)))

    # Case 2: force the spatially-tiled path (K = 2) with a ragged last tile,
    # exercising the masked-last-tile branch: HW = 13*13 = 169, hw_tile = 128.
    H2, W2 = 13, 13
    x2 = jax.random.normal(kx, (B, C, H2, W2), dtype=jnp.float32)
    out2 = jax.block_until_ready(
        channel_attention(x2, w1, w2, vmem_tile_budget_bytes=2 * C * 128 * 4))
    ref2 = reference(x2, w1, w2)
    assert out2.shape == (B, C, 1, 1), out2.shape
    assert jnp.allclose(out2, ref2, atol=1e-5, rtol=1e-5), \
        float(jnp.max(jnp.abs(out2 - ref2)))

    # Case 3: small spatial extent with several batch blocks (bt = 8, grid (2, 1)).
    B3, H3, W3 = 16, 7, 7
    x3 = jax.random.normal(kx, (B3, C, H3, W3), dtype=jnp.float32)
    out3 = jax.block_until_ready(channel_attention(x3, w1, w2))
    ref3 = reference(x3, w1, w2)
    assert out3.shape == (B3, C, 1, 1), out3.shape
    assert jnp.allclose(out3, ref3, atol=1e-5, rtol=1e-5), \
        float(jnp.max(jnp.abs(out3 - ref3)))

    print("KERNEL_OK")
</pallas_src>

<mosaic_0001>
module attributes {stable_mosaic.version = 11 : i64} {
  func.func @kernel(%arg0: i32, %arg1: i32, %arg2: memref<2x32x256xf32, #tpu.memory_space<vmem>>, %arg3: memref<4x32xf32, #tpu.memory_space<vmem>>, %arg4: memref<4x32xf32, #tpu.memory_space<vmem>>, %arg5: memref<2x32xf32, #tpu.memory_space<vmem>>, %arg6: memref<2x32x1xf32, #tpu.memory_space<vmem>>, %arg7: memref<2x32x1xf32, #tpu.memory_space<vmem>>) attributes {dimension_semantics = [#tpu.dimension_semantics<parallel>, #tpu.dimension_semantics<arbitrary>], iteration_bounds = array<i64: 1, 1>, scalar_prefetch = 0 : i64, scratch_operands = 2 : i64, tpu.core_type = #tpu.core_type<tc>, window_params = [{transform_indices = @transform_0, window_bounds = array<i64: 2, 32, 256>}, {pipeline_mode = #tpu.pipeline_mode<synchronous>, transform_indices = @transform_1, window_bounds = array<i64: 4, 32>}, {pipeline_mode = #tpu.pipeline_mode<synchronous>, transform_indices = @transform_2, window_bounds = array<i64: 4, 32>}, {transform_indices = @transform_3, window_bounds = array<i64: 2, 32>}]} {
    %c0_i32 = arith.constant 0 : i32
    %0 = arith.cmpi eq, %arg1, %c0_i32 : i32
    %1 = arith.extui %0 : i1 to i32
    %c0_i32_0 = arith.constant 0 : i32
    %2 = arith.cmpi ne, %1, %c0_i32_0 : i32
    scf.if %2 {
      %cst_18 = arith.constant 0.000000e+00 : f32
      %17 = vector.broadcast %cst_18 : f32 to vector<2x32x1xf32>
      %c0_19 = arith.constant 0 : index
      %c0_20 = arith.constant 0 : index
      %c0_21 = arith.constant 0 : index
      %18 = vector.load %arg6[%c0_19, %c0_20, %c0_21] : memref<2x32x1xf32, #tpu.memory_space<vmem>>, vector<2x32x1xf32>
      tpu.vector_store %arg6[%c0_19, %c0_20, %c0_21], %17 {strides = array<i32>} : memref<2x32x1xf32, #tpu.memory_space<vmem>>, vector<2x32x1xf32>,
      %cst_22 = arith.constant 0xFF800000 : f32
      %19 = vector.broadcast %cst_22 : f32 to vector<2x32x1xf32>
      %c0_23 = arith.constant 0 : index
      %c0_24 = arith.constant 0 : index
      %c0_25 = arith.constant 0 : index
      %20 = vector.load %arg7[%c0_23, %c0_24, %c0_25] : memref<2x32x1xf32, #tpu.memory_space<vmem>>, vector<2x32x1xf32>
      tpu.vector_store %arg7[%c0_23, %c0_24, %c0_25], %19 {strides = array<i32>} : memref<2x32x1xf32, #tpu.memory_space<vmem>>, vector<2x32x1xf32>,
    } else {
    }
    %c0 = arith.constant 0 : index
    %c0_1 = arith.constant 0 : index
    %c0_2 = arith.constant 0 : index
    %3 = vector.load %arg2[%c0, %c0_1, %c0_2] : memref<2x32x256xf32, #tpu.memory_space<vmem>>, vector<2x32x256xf32>
    %c0_3 = arith.constant 0 : index
    %c0_4 = arith.constant 0 : index
    %c0_5 = arith.constant 0 : index
    %4 = vector.load %arg6[%c0_3, %c0_4, %c0_5] : memref<2x32x1xf32, #tpu.memory_space<vmem>>, vector<2x32x1xf32>
    %cst = arith.constant dense<0.000000e+00> : vector<2x32xf32>
    %5 = vector.multi_reduction <add>, %3, %cst [2] : vector<2x32x256xf32> to vector<2x32xf32>
    %6 = vector.shape_cast %5 : vector<2x32xf32> to vector<2x32x1xf32>
    %7 = arith.addf %4, %6 : vector<2x32x1xf32>
    %c0_6 = arith.constant 0 : index
    %c0_7 = arith.constant 0 : index
    %c0_8 = arith.constant 0 : index
    %8 = vector.load %arg6[%c0_6, %c0_7, %c0_8] : memref<2x32x1xf32, #tpu.memory_space<vmem>>, vector<2x32x1xf32>
    tpu.vector_store %arg6[%c0_6, %c0_7, %c0_8], %7 {strides = array<i32>} : memref<2x32x1xf32, #tpu.memory_space<vmem>>, vector<2x32x1xf32>,
    %c0_9 = arith.constant 0 : index
    %c0_10 = arith.constant 0 : index
    %c0_11 = arith.constant 0 : index
    %9 = vector.load %arg7[%c0_9, %c0_10, %c0_11] : memref<2x32x1xf32, #tpu.memory_space<vmem>>, vector<2x32x1xf32>
    %cst_12 = arith.constant dense<0xFF800000> : vector<2x32xf32>
    %10 = vector.multi_reduction <maximumf>, %3, %cst_12 [2] : vector<2x32x256xf32> to vector<2x32xf32>
    %11 = vector.shape_cast %10 : vector<2x32xf32> to vector<2x32x1xf32>
    %12 = arith.maximumf %9, %11 : vector<2x32x1xf32>
    %c0_13 = arith.constant 0 : index
    %c0_14 = arith.constant 0 : index
    %c0_15 = arith.constant 0 : index
    %13 = vector.load %arg7[%c0_13, %c0_14, %c0_15] : memref<2x32x1xf32, #tpu.memory_space<vmem>>, vector<2x32x1xf32>
    tpu.vector_store %arg7[%c0_13, %c0_14, %c0_15], %12 {strides = array<i32>} : memref<2x32x1xf32, #tpu.memory_space<vmem>>, vector<2x32x1xf32>,
    %c0_i32_16 = arith.constant 0 : i32
    %14 = arith.cmpi eq, %arg1, %c0_i32_16 : i32
    %15 = arith.extui %14 : i1 to i32
    %c0_i32_17 = arith.constant 0 : i32
    %16 = arith.cmpi ne, %15, %c0_i32_17 : i32
    scf.if %16 {
      %c0_18 = arith.constant 0 : index
      %c0_19 = arith.constant 0 : index
      %c0_20 = arith.constant 0 : index
      %17 = vector.load %arg6[%c0_18, %c0_19, %c0_20] : memref<2x32x1xf32, #tpu.memory_space<vmem>>, vector<1x32x1xf32>
      %18 = vector.shape_cast %17 : vector<1x32x1xf32> to vector<32x1xf32>
      %cst_21 = arith.constant 3.906250e-03 : f32
      %19 = vector.broadcast %cst_21 : f32 to vector<32x1xf32>
      %20 = arith.mulf %18, %19 : vector<32x1xf32>
      %c0_22 = arith.constant 0 : index
      %c0_23 = arith.constant 0 : index
      %c0_24 = arith.constant 0 : index
      %21 = vector.load %arg7[%c0_22, %c0_23, %c0_24] : memref<2x32x1xf32, #tpu.memory_space<vmem>>, vector<1x32x1xf32>
      %22 = vector.shape_cast %21 : vector<1x32x1xf32> to vector<32x1xf32>
      %c0_25 = arith.constant 0 : index
      %c0_26 = arith.constant 0 : index
      %23 = vector.load %arg3[%c0_25, %c0_26] : memref<4x32xf32, #tpu.memory_space<vmem>>, vector<4x32xf32>
      %cst_27 = arith.constant dense<0.000000e+00> : vector<4x1xf32>
      %24 = tpu.matmul %23, %20, %cst_27 {dimension_numbers = #tpu.dot_dimension_numbers<[1], [0], [0], [1], [0, 0, 1, 1], [], []>} : vector<4x32xf32>, vector<32x1xf32>, vector<4x1xf32> -> vector<4x1xf32>
      %cst_28 = arith.constant 0.000000e+00 : f32
      %25 = vector.broadcast %cst_28 : f32 to vector<4x1xf32>
      %26 = arith.maximumf %24, %25 : vector<4x1xf32>
      %c0_29 = arith.constant 0 : index
      %c0_30 = arith.constant 0 : index
      %27 = vector.load %arg3[%c0_29, %c0_30] : memref<4x32xf32, #tpu.memory_space<vmem>>, vector<4x32xf32>
      %cst_31 = arith.constant dense<0.000000e+00> : vector<4x1xf32>
      %28 = tpu.matmul %27, %22, %cst_31 {dimension_numbers = #tpu.dot_dimension_numbers<[1], [0], [0], [1], [0, 0, 1, 1], [], []>} : vector<4x32xf32>, vector<32x1xf32>, vector<4x1xf32> -> vector<4x1xf32>
      %cst_32 = arith.constant 0.000000e+00 : f32
      %29 = vector.broadcast %cst_32 : f32 to vector<4x1xf32>
      %30 = arith.maximumf %28, %29 : vector<4x1xf32>
      %31 = arith.addf %26, %30 : vector<4x1xf32>
      %c0_33 = arith.constant 0 : index
      %c0_34 = arith.constant 0 : index
      %32 = vector.load %arg4[%c0_33, %c0_34] : memref<4x32xf32, #tpu.memory_space<vmem>>, vector<4x32xf32>
      %cst_35 = arith.constant dense<0.000000e+00> : vector<1x32xf32>
      %33 = tpu.matmul %31, %32, %cst_35 {dimension_numbers = #tpu.dot_dimension_numbers<[0], [0], [1], [1], [0, 1, 1, 1], [], []>} : vector<4x1xf32>, vector<4x32xf32>, vector<1x32xf32> -> vector<1x32xf32>
      %34 = arith.negf %33 : vector<1x32xf32>
      %35 = math.exp %34 : vector<1x32xf32>
      %cst_36 = arith.constant 1.000000e+00 : f32
      %36 = vector.broadcast %cst_36 : f32 to vector<1x32xf32>
      %37 = arith.addf %36, %35 : vector<1x32xf32>
      %38 = arith.divf %36, %37 : vector<1x32xf32>
      %c0_37 = arith.constant 0 : index
      %c0_38 = arith.constant 0 : index
      %39 = vector.load %arg5[%c0_37, %c0_38] : memref<2x32xf32, #tpu.memory_space<vmem>>, vector<1x32xf32>
      tpu.vector_store %arg5[%c0_37, %c0_38], %38 {strides = array<i32>} : memref<2x32xf32, #tpu.memory_space<vmem>>, vector<1x32xf32>,
      %c1 = arith.constant 1 : index
      %c0_39 = arith.constant 0 : index
      %c0_40 = arith.constant 0 : index
      %40 = vector.load %arg6[%c1, %c0_39, %c0_40] : memref<2x32x1xf32, #tpu.memory_space<vmem>>, vector<1x32x1xf32>
      %41 = vector.shape_cast %40 : vector<1x32x1xf32> to vector<32x1xf32>
      %cst_41 = arith.constant 3.906250e-03 : f32
      %42 = vector.broadcast %cst_41 : f32 to vector<32x1xf32>
      %43 = arith.mulf %41, %42 : vector<32x1xf32>
      %c1_42 = arith.constant 1 : index
      %c0_43 = arith.constant 0 : index
      %c0_44 = arith.constant 0 : index
      %44 = vector.load %arg7[%c1_42, %c0_43, %c0_44] : memref<2x32x1xf32, #tpu.memory_space<vmem>>, vector<1x32x1xf32>
      %45 = vector.shape_cast %44 : vector<1x32x1xf32> to vector<32x1xf32>
      %c0_45 = arith.constant 0 : index
      %c0_46 = arith.constant 0 : index
      %46 = vector.load %arg3[%c0_45, %c0_46] : memref<4x32xf32, #tpu.memory_space<vmem>>, vector<4x32xf32>
      %cst_47 = arith.constant dense<0.000000e+00> : vector<4x1xf32>
      %47 = tpu.matmul %46, %43, %cst_47 {dimension_numbers = #tpu.dot_dimension_numbers<[1], [0], [0], [1], [0, 0, 1, 1], [], []>} : vector<4x32xf32>, vector<32x1xf32>, vector<4x1xf32> -> vector<4x1xf32>
      %cst_48 = arith.constant 0.000000e+00 : f32
      %48 = vector.broadcast %cst_48 : f32 to vector<4x1xf32>
      %49 = arith.maximumf %47, %48 : vector<4x1xf32>
      %c0_49 = arith.constant 0 : index
      %c0_50 = arith.constant 0 : index
      %50 = vector.load %arg3[%c0_49, %c0_50] : memref<4x32xf32, #tpu.memory_space<vmem>>, vector<4x32xf32>
      %cst_51 = arith.constant dense<0.000000e+00> : vector<4x1xf32>
      %51 = tpu.matmul %50, %45, %cst_51 {dimension_numbers = #tpu.dot_dimension_numbers<[1], [0], [0], [1], [0, 0, 1, 1], [], []>} : vector<4x32xf32>, vector<32x1xf32>, vector<4x1xf32> -> vector<4x1xf32>
      %cst_52 = arith.constant 0.000000e+00 : f32
      %52 = vector.broadcast %cst_52 : f32 to vector<4x1xf32>
      %53 = arith.maximumf %51, %52 : vector<4x1xf32>
      %54 = arith.addf %49, %53 : vector<4x1xf32>
      %c0_53 = arith.constant 0 : index
      %c0_54 = arith.constant 0 : index
      %55 = vector.load %arg4[%c0_53, %c0_54] : memref<4x32xf32, #tpu.memory_space<vmem>>, vector<4x32xf32>
      %cst_55 = arith.constant dense<0.000000e+00> : vector<1x32xf32>
      %56 = tpu.matmul %54, %55, %cst_55 {dimension_numbers = #tpu.dot_dimension_numbers<[0], [0], [1], [1], [0, 1, 1, 1], [], []>} : vector<4x1xf32>, vector<4x32xf32>, vector<1x32xf32> -> vector<1x32xf32>
      %57 = arith.negf %56 : vector<1x32xf32>
      %58 = math.exp %57 : vector<1x32xf32>
      %cst_56 = arith.constant 1.000000e+00 : f32
      %59 = vector.broadcast %cst_56 : f32 to vector<1x32xf32>
      %60 = arith.addf %59, %58 : vector<1x32xf32>
      %61 = arith.divf %59, %60 : vector<1x32xf32>
      %c1_57 = arith.constant 1 : index
      %c0_58 = arith.constant 0 : index
      %62 = vector.load %arg5[%c1_57, %c0_58] : memref<2x32xf32, #tpu.memory_space<vmem>>, vector<1x32xf32>
      tpu.vector_store %arg5[%c1_57, %c0_58], %61 {strides = array<i32>} : memref<2x32xf32, #tpu.memory_space<vmem>>, vector<1x32xf32>,
    } else {
    }
    return
  }
  func.func @transform_0(%arg0: i32, %arg1: i32) -> (i32, i32, i32) {
    %c0_i32 = arith.constant 0 : i32
    %c0_i32_0 = arith.constant 0 : i32
    return %arg0, %c0_i32, %arg1 : i32, i32, i32
  }
  func.func @transform_1(%arg0: i32, %arg1: i32) -> (i32, i32) {
    %c0_i32 = arith.constant 0 : i32
    %c0_i32_0 = arith.constant 0 : i32
    %c0_i32_1 = arith.constant 0 : i32
    return %c0_i32, %c0_i32_0 : i32, i32
  }
  func.func @transform_2(%arg0: i32, %arg1: i32) -> (i32, i32) {
    %c0_i32 = arith.constant 0 : i32
    %c0_i32_0 = arith.constant 0 : i32
    %c0_i32_1 = arith.constant 0 : i32
    return %c0_i32, %c0_i32_0 : i32, i32
  }
  func.func @transform_3(%arg0: i32, %arg1: i32) -> (i32, i32) {
    %c0_i32 = arith.constant 0 : i32
    %c0_i32_0 = arith.constant 0 : i32
    return %arg0, %c0_i32 : i32, i32
  }
}

</mosaic_0001>

<llo_original>
// kernel: tpu_custom_call.1
$region0: #{tpu_custom_call.1}
  #allocation0 [shape = 'u32[]', space=smem, size = 0x4, offset = 0x4, fixed_abs, tag = 'smem constant byte address 0x4 - core index']
  #allocation1 [shape = 'u32[144,128]{1,0:T(1,128)}', space=vmem, size = 0x12000, scoped, tag = 'internal scratch']
  #allocation2 [shape = 'f32[2,32,1]{2,1,0:T(8,128)}', space=vmem, size = 0x8000, scoped, tag = 'scratch operand']
  #allocation3 [shape = 'f32[2,32,1]{2,1,0:T(8,128)}', space=vmem, size = 0x8000, scoped, tag = 'scratch operand']
  %s0 = inlined_call_operand.hbm [shape: f32[2,32,256], index: 0, kind: input, shape index: {}]
  %s1 = inlined_call_operand.hbm [shape: f32[4,32], index: 1, kind: input, shape index: {}]
  %s2 = inlined_call_operand.vmem [shape: f32[4,32], index: 2, kind: input, shape index: {}]
  %s3 = inlined_call_operand.hbm [shape: f32[2,32], index: 3, kind: output, shape index: {}]
  %s4 = sld [smem:[#allocation0]]
  $region38: #{tpu_custom_call.1} parent=0
    _
  %s6 = ssub.s32 1, %s4
  %s7 = scalar_select 0, %s6, %s4
  $region1: #{tpu_custom_call.1} parent=0
    #allocation4 [shape = 'u8[65536]{0}', space=vmem, size = 0x10000, scoped, tag = 'input window, operand 0, single buffered']
    #allocation5 [shape = 's32[1]{0}', space=sflag, size = 0x4, scoped, tag = 'scoped memory for tpu_custom_call.1']
    #allocation6 [shape = 's32[1]{0}', space=sflag, size = 0x4, scoped, tag = 'scoped memory for tpu_custom_call.1']
    #allocation7 [shape = 'u8[2048]{0}', space=vmem, size = 0x800, scoped, tag = 'input window, operand 1, single buffered']
    #allocation8 [shape = 's32[1]{0}', space=sflag, size = 0x4, scoped, tag = 'scoped memory for tpu_custom_call.1']
    #allocation9 [shape = 'u8[1024]{0}', space=vmem, size = 0x400, scoped, tag = 'output window, operand 0, single buffered']
    %8 = vsyncpa [#allocation5], 0
    %9 = vsyncpa [#allocation8], 0
    %10 = vsyncpa [#allocation6], 0
    // Predicated region
    $region2: #{tpu_custom_call.1} parent=1 // pred_check
      _
    $region3: #{tpu_custom_call.1} parent=1 // pred_check_branch
      %12 = sbr.rel (0) target = $region5
    $region4: #{tpu_custom_call.1} parent=1 // pred_region
      %s14 = ssub.s32 2048, 2048
      %15 = vsyncadd [#allocation5], %s14
      %s16 = sshll.u32 [#allocation4], 4
      %s17 = int_to_ptr.vmem [resolvable:$true] %s16
      %22 = dma.hbm_to_vmem [thread:$0]  %s0, 2048, %s17, [#allocation5], 256, 256, 16
    $region5: #{tpu_custom_call.1} parent=1 // pred_fallthru
      _
    // Predicated region
    $region6: #{tpu_custom_call.1} parent=1 // pred_check
      _
    $region7: #{tpu_custom_call.1} parent=1 // pred_check_branch
      %24 = sbr.rel (0) target = $region9
    $region8: #{tpu_custom_call.1} parent=1 // pred_region
      %s26 = ssub.s32 64, 64
      %27 = vsyncadd [#allocation8], %s26
      %s29 = sshll.u32 [#allocation7], 4
      %s30 = int_to_ptr.vmem [resolvable:$true] %s29
      %32 = dma.hbm_to_vmem [thread:$0]  %s1, 64, %s30, [#allocation8]
    $region9: #{tpu_custom_call.1} parent=1 // pred_fallthru
      _
    // Predicated region
    $region10: #{tpu_custom_call.1} parent=1 // pred_check
      _
    $region11: #{tpu_custom_call.1} parent=1 // pred_check_branch
      %34 = sbr.rel (0) target = $region13
    $region12: #{tpu_custom_call.1} parent=1 // pred_region
      _
    $region13: #{tpu_custom_call.1} parent=1 // pred_fallthru
      _
    // Predicated region
    $region14: #{tpu_custom_call.1} parent=1 // pred_check
      _
    $region15: #{tpu_custom_call.1} parent=1 // pred_check_branch
      %36 = sbr.rel (0) target = $region17
    $region16: #{tpu_custom_call.1} parent=1 // pred_region
      %37 = dma.done [#allocation5], 2048
    $region17: #{tpu_custom_call.1} parent=1 // pred_fallthru
      _
    // Predicated region
    $region18: #{tpu_custom_call.1} parent=1 // pred_check
      _
    $region19: #{tpu_custom_call.1} parent=1 // pred_check_branch
      %39 = sbr.rel (0) target = $region21
    $region20: #{tpu_custom_call.1} parent=1 // pred_region
      %40 = dma.done [#allocation8], 64
    $region21: #{tpu_custom_call.1} parent=1 // pred_fallthru
      _
    %p41 = scmp.eq.s32.totalorder 0, 0
    // Predicated region
    $region22: #{tpu_custom_call.1} parent=1 // pred_check
      %p42 = pneg %p41
    $region23: #{tpu_custom_call.1} parent=1 // pred_check_branch
      %44 = sbr.rel (%p42) target = $region25
    $region24: #{tpu_custom_call.1} parent=1 // pred_region
      %vm45 = vcmask 7168
      %46 = vst.msk [vmem:[#allocation2] sm:$0xff] %vm45, 0.0
      %47 = vst.msk [vmem:[#allocation2 + $0x8] sm:$0xff] %vm45, 0.0
      %48 = vst.msk [vmem:[#allocation2 + $0x10] sm:$0xff] %vm45, 0.0
      %49 = vst.msk [vmem:[#allocation2 + $0x18] sm:$0xff] %vm45, 0.0
      %50 = vst.msk [vmem:[#allocation2 + $0x20] sm:$0xff] %vm45, 0.0
      %51 = vst.msk [vmem:[#allocation2 + $0x28] sm:$0xff] %vm45, 0.0
      %52 = vst.msk [vmem:[#allocation2 + $0x30] sm:$0xff] %vm45, 0.0
      %53 = vst.msk [vmem:[#allocation2 + $0x38] sm:$0xff] %vm45, 0.0
      %54 = vst.msk [vmem:[#allocation3] sm:$0xff] %vm45, -inf
      %55 = vst.msk [vmem:[#allocation3 + $0x8] sm:$0xff] %vm45, -inf
      %56 = vst.msk [vmem:[#allocation3 + $0x10] sm:$0xff] %vm45, -inf
      %57 = vst.msk [vmem:[#allocation3 + $0x18] sm:$0xff] %vm45, -inf
      %58 = vst.msk [vmem:[#allocation3 + $0x20] sm:$0xff] %vm45, -inf
      %59 = vst.msk [vmem:[#allocation3 + $0x28] sm:$0xff] %vm45, -inf
      %60 = vst.msk [vmem:[#allocation3 + $0x30] sm:$0xff] %vm45, -inf
      %61 = vst.msk [vmem:[#allocation3 + $0x38] sm:$0xff] %vm45, -inf
    $region25: #{tpu_custom_call.1} parent=1 // pred_fallthru
      _
    %v62 = vld [vmem:[#allocation4] sm:$0xff]
    %v63 = vld [vmem:[#allocation4 + $0x8] sm:$0xff]
    %v64 = vld [vmem:[#allocation4 + $0x10] sm:$0xff]
    %v65 = vld [vmem:[#allocation4 + $0x18] sm:$0xff]
    %v66 = vld [vmem:[#allocation4 + $0x20] sm:$0xff]
    %v67 = vld [vmem:[#allocation4 + $0x28] sm:$0xff]
    %v68 = vld [vmem:[#allocation4 + $0x30] sm:$0xff]
    %v69 = vld [vmem:[#allocation4 + $0x38] sm:$0xff]
    %v70 = vld [vmem:[#allocation4 + $0x40] sm:$0xff]
    %v71 = vld [vmem:[#allocation4 + $0x48] sm:$0xff]
    %v72 = vld [vmem:[#allocation4 + $0x50] sm:$0xff]
    %v73 = vld [vmem:[#allocation4 + $0x58] sm:$0xff]
    %v74 = vld [vmem:[#allocation4 + $0x60] sm:$0xff]
    %v75 = vld [vmem:[#allocation4 + $0x68] sm:$0xff]
    %v76 = vld [vmem:[#allocation4 + $0x70] sm:$0xff]
    %v77 = vld [vmem:[#allocation4 + $0x78] sm:$0xff]
    %v78 = vld [vmem:[#allocation2] sm:$0xff]
    %v79 = vld [vmem:[#allocation2 + $0x8] sm:$0xff]
    %v80 = vld [vmem:[#allocation2 + $0x10] sm:$0xff]
    %v81 = vld [vmem:[#allocation2 + $0x18] sm:$0xff]
    %v82 = vld [vmem:[#allocation2 + $0x20] sm:$0xff]
    %v83 = vld [vmem:[#allocation2 + $0x28] sm:$0xff]
    %v84 = vld [vmem:[#allocation2 + $0x30] sm:$0xff]
    %v85 = vld [vmem:[#allocation2 + $0x38] sm:$0xff]
    %v86 = vadd.f32 %v62, %v63
    %87 = vadd.xlane.f32.xlu0 %v86
    %v88 = vpop.xlane.xlu0 %87
    %v89 = vadd.f32 %v64, %v65
    %90 = vadd.xlane.f32.xlu0 %v89
    %v91 = vpop.xlane.xlu0 %90
    %v92 = vadd.f32 %v66, %v67
    %93 = vadd.xlane.f32.xlu0 %v92
    %v94 = vpop.xlane.xlu0 %93
    %v95 = vadd.f32 %v68, %v69
    %96 = vadd.xlane.f32.xlu0 %v95
    %v97 = vpop.xlane.xlu0 %96
    %v98 = vadd.f32 %v70, %v71
    %99 = vadd.xlane.f32.xlu0 %v98
    %v100 = vpop.xlane.xlu0 %99
    %v101 = vadd.f32 %v72, %v73
    %102 = vadd.xlane.f32.xlu0 %v101
    %v103 = vpop.xlane.xlu0 %102
    %v104 = vadd.f32 %v74, %v75
    %105 = vadd.xlane.f32.xlu0 %v104
    %v106 = vpop.xlane.xlu0 %105
    %v107 = vadd.f32 %v76, %v77
    %108 = vadd.xlane.f32.xlu0 %v107
    %v109 = vpop.xlane.xlu0 %108
    %v110 = vadd.f32 %v78, %v88
    %v111 = vadd.f32 %v79, %v91
    %v112 = vadd.f32 %v80, %v94
    %v113 = vadd.f32 %v81, %v97
    %v114 = vadd.f32 %v82, %v100
    %v115 = vadd.f32 %v83, %v103
    %v116 = vadd.f32 %v84, %v106
    %v117 = vadd.f32 %v85, %v109
    %vm118 = vcmask 7168
    %119 = vst.msk [vmem:[#allocation2] sm:$0xff] %vm118, %v110
    %120 = vst.msk [vmem:[#allocation2 + $0x8] sm:$0xff] %vm118, %v111
    %121 = vst.msk [vmem:[#allocation2 + $0x10] sm:$0xff] %vm118, %v112
    %122 = vst.msk [vmem:[#allocation2 + $0x18] sm:$0xff] %vm118, %v113
    %123 = vst.msk [vmem:[#allocation2 + $0x20] sm:$0xff] %vm118, %v114
    %124 = vst.msk [vmem:[#allocation2 + $0x28] sm:$0xff] %vm118, %v115
    %125 = vst.msk [vmem:[#allocation2 + $0x30] sm:$0xff] %vm118, %v116
    %126 = vst.msk [vmem:[#allocation2 + $0x38] sm:$0xff] %vm118, %v117
    %v127 = vld [vmem:[#allocation3] sm:$0xff]
    %v128 = vld [vmem:[#allocation3 + $0x8] sm:$0xff]
    %v129 = vld [vmem:[#allocation3 + $0x10] sm:$0xff]
    %v130 = vld [vmem:[#allocation3 + $0x18] sm:$0xff]
    %v131 = vld [vmem:[#allocation3 + $0x20] sm:$0xff]
    %v132 = vld [vmem:[#allocation3 + $0x28] sm:$0xff]
    %v133 = vld [vmem:[#allocation3 + $0x30] sm:$0xff]
    %v134 = vld [vmem:[#allocation3 + $0x38] sm:$0xff]
    %v135 = vmax.f32 %v62, %v63
    %136 = vmax.xlane.f32.xlu0 %v135
    %v137 = vpop.xlane.xlu0 %136
    %v138 = vmax.f32 %v64, %v65
    %139 = vmax.xlane.f32.xlu0 %v138
    %v140 = vpop.xlane.xlu0 %139
    %v141 = vmax.f32 %v66, %v67
    %142 = vmax.xlane.f32.xlu0 %v141
    %v143 = vpop.xlane.xlu0 %142
    %v144 = vmax.f32 %v68, %v69
    %145 = vmax.xlane.f32.xlu0 %v144
    %v146 = vpop.xlane.xlu0 %145
    %v147 = vmax.f32 %v70, %v71
    %148 = vmax.xlane.f32.xlu0 %v147
    %v149 = vpop.xlane.xlu0 %148
    %v150 = vmax.f32 %v72, %v73
    %151 = vmax.xlane.f32.xlu0 %v150
    %v152 = vpop.xlane.xlu0 %151
    %v153 = vmax.f32 %v74, %v75
    %154 = vmax.xlane.f32.xlu0 %v153
    %v155 = vpop.xlane.xlu0 %154
    %v156 = vmax.f32 %v76, %v77
    %157 = vmax.xlane.f32.xlu0 %v156
    %v158 = vpop.xlane.xlu0 %157
    %v159 = vmax.f32 %v127, %v137
    %v160 = vmax.f32 %v128, %v140
    %v161 = vmax.f32 %v129, %v143
    %v162 = vmax.f32 %v130, %v146
    %v163 = vmax.f32 %v131, %v149
    %v164 = vmax.f32 %v132, %v152
    %v165 = vmax.f32 %v133, %v155
    %v166 = vmax.f32 %v134, %v158
    %167 = vst.msk [vmem:[#allocation3] sm:$0xff] %vm118, %v159
    %168 = vst.msk [vmem:[#allocation3 + $0x8] sm:$0xff] %vm118, %v160
    %169 = vst.msk [vmem:[#allocation3 + $0x10] sm:$0xff] %vm118, %v161
    %170 = vst.msk [vmem:[#allocation3 + $0x18] sm:$0xff] %vm118, %v162
    %171 = vst.msk [vmem:[#allocation3 + $0x20] sm:$0xff] %vm118, %v163
    %172 = vst.msk [vmem:[#allocation3 + $0x28] sm:$0xff] %vm118, %v164
    %173 = vst.msk [vmem:[#allocation3 + $0x30] sm:$0xff] %vm118, %v165
    %174 = vst.msk [vmem:[#allocation3 + $0x38] sm:$0xff] %vm118, %v166
    // Predicated region
    $region26: #{tpu_custom_call.1} parent=1 // pred_check
      %p175 = pneg %p41
    $region27: #{tpu_custom_call.1} parent=1 // pred_check_branch
      %177 = sbr.rel (%p175) target = $region29
    $region28: #{tpu_custom_call.1} parent=1 // pred_region
      %v178 = vld [vmem:[#allocation2] sm:$0xff]
      %v179 = vld [vmem:[#allocation2 + $0x8] sm:$0xff]
      %v180 = vld [vmem:[#allocation2 + $0x10] sm:$0xff]
      %v181 = vld [vmem:[#allocation2 + $0x18] sm:$0xff]
      %v182 = vmul.f32 %v178, 0.00390625
      %v183 = vmul.f32 %v179, 0.00390625
      %v184 = vmul.f32 %v180, 0.00390625
      %v185 = vmul.f32 %v181, 0.00390625
      %v186 = vld [vmem:[#allocation3] sm:$0xff]
      %v187 = vld [vmem:[#allocation3 + $0x8] sm:$0xff]
      %v188 = vld [vmem:[#allocation3 + $0x10] sm:$0xff]
      %v189 = vld [vmem:[#allocation3 + $0x18] sm:$0xff]
      %v190 = vld [vmem:[#allocation7] sm:$0xf]
      %vm191 = vcmask 261120
      %v193 = vsel %vm191, %v190, 0
      %195 = vmatprep.subr.mxu0 0.0
      %196 = vmatpush1.msra.mxu0 %v182
      %197 = vmatprep.subr.mxu0 0.0
      %198 = vmatpush1.msra.mxu0 %v183
      %199 = vmatprep.subr.mxu0 0.0
      %200 = vmatpush1.msra.mxu0 %v184
      %201 = vmatprep.subr.mxu0 0.0
      %202 = vmatpush1.msra.mxu0 %v185
      %203 = vmatprep.subr.mxu0 0.0
      %204 = vmatpush1.msra.mxu0 0.0
      %205 = vmatprep.subr.mxu0 0.0
      %206 = vmatpush1.msra.mxu0 0.0
      %207 = vmatprep.subr.mxu0 0.0
      %208 = vmatpush1.msra.mxu0 0.0
      %209 = vmatprep.subr.mxu0 0.0
      %210 = vmatpush1.msra.mxu0 0.0
      %211 = vmatprep.subr.mxu0 0.0
      %212 = vmatpush1.msra.mxu0 0.0
      %213 = vmatprep.subr.mxu0 0.0
      %214 = vmatpush1.msra.mxu0 0.0
      %215 = vmatprep.subr.mxu0 0.0
      %216 = vmatpush1.msra.mxu0 0.0
      %217 = vmatprep.subr.mxu0 0.0
      %218 = vmatpush1.msra.mxu0 0.0
      %219 = vmatprep.subr.mxu0 0.0
      %220 = vmatpush1.msra.mxu0 0.0
      %221 = vmatprep.subr.mxu0 0.0
      %222 = vmatpush1.msra.mxu0 0.0
      %223 = vmatprep.subr.mxu0 0.0
      %224 = vmatpush1.msra.mxu0 0.0
      %225 = vmatprep.subr.mxu0 0.0
      %226 = vmatpush1.msra.mxu0 0.0
      %227 = vmatprep.subr.mxu0 0.0
      %228 = vmatpush1.msra.mxu0 0.0
      %229 = vmatprep.subr.mxu0 0.0
      %230 = vmatpush1.msra.mxu0 0.0
      %231 = vmatprep.subr.mxu0 0.0
      %232 = vmatpush1.msra.mxu0 0.0
      %233 = vmatprep.subr.mxu0 0.0
      %234 = vmatpush1.msra.mxu0 0.0
      %235 = vmatprep.subr.mxu0 0.0
      %236 = vmatpush1.msra.mxu0 0.0
      %237 = vmatprep.subr.mxu0 0.0
      %238 = vmatpush1.msra.mxu0 0.0
      %239 = vmatprep.subr.mxu0 0.0
      %240 = vmatpush1.msra.mxu0 0.0
      %241 = vmatprep.subr.mxu0 0.0
      %242 = vmatpush1.msra.mxu0 0.0
      %243 = vmatprep.subr.mxu0 0.0
      %244 = vmatpush1.msra.mxu0 0.0
      %245 = vmatprep.subr.mxu0 0.0
      %246 = vmatpush1.msra.mxu0 0.0
      %247 = vmatprep.subr.mxu0 0.0
      %248 = vmatpush1.msra.mxu0 0.0
      %249 = vmatprep.subr.mxu0 0.0
      %250 = vmatpush1.msra.mxu0 0.0
      %251 = vmatprep.subr.mxu0 0.0
      %252 = vmatpush1.msra.mxu0 0.0
      %253 = vmatprep.subr.mxu0 0.0
      %254 = vmatpush1.msra.mxu0 0.0
      %255 = vmatprep.subr.mxu0 0.0
      %256 = vmatpush1.msra.mxu0 0.0
      %257 = vmatprep.subr.mxu0 0.0
      %258 = vmatpush1.msra.mxu0 0.0
      %259 = vmatprep.mubr.f32.mxu0 0.0
      %260 = vmatmul.mubr.f32.gmra.mrb[0].mxu0 %v193
      %v261 = vpop.f32.mrb[0].mxu0
      %v262 = vadd.f32 0.0, %v261
      %v263 = vpop.f32.mrb[0].mxu0
      %264 = vdwg.mxu0
      %v265 = vmax.f32 %v262, 0.0
      %266 = vmatprep.subr.mxu0 0.0
      %267 = vmatpush1.msra.mxu0 %v186
      %268 = vmatprep.subr.mxu0 0.0
      %269 = vmatpush1.msra.mxu0 %v187
      %270 = vmatprep.subr.mxu0 0.0
      %271 = vmatpush1.msra.mxu0 %v188
      %272 = vmatprep.subr.mxu0 0.0
      %273 = vmatpush1.msra.mxu0 %v189
      %274 = vmatprep.subr.mxu0 0.0
      %275 = vmatpush1.msra.mxu0 0.0
      %276 = vmatprep.subr.mxu0 0.0
      %277 = vmatpush1.msra.mxu0 0.0
      %278 = vmatprep.subr.mxu0 0.0
      %279 = vmatpush1.msra.mxu0 0.0
      %280 = vmatprep.subr.mxu0 0.0
      %281 = vmatpush1.msra.mxu0 0.0
      %282 = vmatprep.subr.mxu0 0.0
      %283 = vmatpush1.msra.mxu0 0.0
      %284 = vmatprep.subr.mxu0 0.0
      %285 = vmatpush1.msra.mxu0 0.0
      %286 = vmatprep.subr.mxu0 0.0
      %287 = vmatpush1.msra.mxu0 0.0
      %288 = vmatprep.subr.mxu0 0.0
      %289 = vmatpush1.msra.mxu0 0.0
      %290 = vmatprep.subr.mxu0 0.0
      %291 = vmatpush1.msra.mxu0 0.0
      %292 = vmatprep.subr.mxu0 0.0
      %293 = vmatpush1.msra.mxu0 0.0
      %294 = vmatprep.subr.mxu0 0.0
      %295 = vmatpush1.msra.mxu0 0.0
      %296 = vmatprep.subr.mxu0 0.0
      %297 = vmatpush1.msra.mxu0 0.0
      %298 = vmatprep.subr.mxu0 0.0
      %299 = vmatpush1.msra.mxu0 0.0
      %300 = vmatprep.subr.mxu0 0.0
      %301 = vmatpush1.msra.mxu0 0.0
      %302 = vmatprep.subr.mxu0 0.0
      %303 = vmatpush1.msra.mxu0 0.0
      %304 = vmatprep.subr.mxu0 0.0
      %305 = vmatpush1.msra.mxu0 0.0
      %306 = vmatprep.subr.mxu0 0.0
      %307 = vmatpush1.msra.mxu0 0.0
      %308 = vmatprep.subr.mxu0 0.0
      %309 = vmatpush1.msra.mxu0 0.0
      %310 = vmatprep.subr.mxu0 0.0
      %311 = vmatpush1.msra.mxu0 0.0
      %312 = vmatprep.subr.mxu0 0.0
      %313 = vmatpush1.msra.mxu0 0.0
      %314 = vmatprep.subr.mxu0 0.0
      %315 = vmatpush1.msra.mxu0 0.0
      %316 = vmatprep.subr.mxu0 0.0
      %317 = vmatpush1.msra.mxu0 0.0
      %318 = vmatprep.subr.mxu0 0.0
      %319 = vmatpush1.msra.mxu0 0.0
      %320 = vmatprep.subr.mxu0 0.0
      %321 = vmatpush1.msra.mxu0 0.0
      %322 = vmatprep.subr.mxu0 0.0
      %323 = vmatpush1.msra.mxu0 0.0
      %324 = vmatprep.subr.mxu0 0.0
      %325 = vmatpush1.msra.mxu0 0.0
      %326 = vmatprep.subr.mxu0 0.0
      %327 = vmatpush1.msra.mxu0 0.0
      %328 = vmatprep.subr.mxu0 0.0
      %329 = vmatpush1.msra.mxu0 0.0
      %330 = vmatprep.mubr.f32.mxu0 0.0
      %331 = vmatmul.mubr.f32.gmra.mrb[0].mxu0 %v193
      %v332 = vpop.f32.mrb[0].mxu0
      %v333 = vadd.f32 0.0, %v332
      %v334 = vpop.f32.mrb[0].mxu0
      %335 = vdwg.mxu0
      %v336 = vmax.f32 %v333, 0.0
      %v337 = vadd.f32 %v265, %v336
      %v338 = vld [vmem:[%s2] sm:$0xf]
      %339 = vxpose.xlu0.b32.start [1/16] %v337, 128
      %340 = vxpose.xlu0.b32.cont [2/16] 0.0, 128
      %341 = vxpose.xlu0.b32.cont [3/16] 0.0, 128
      %342 = vxpose.xlu0.b32.cont [4/16] 0.0, 128
      %343 = vxpose.xlu0.b32.cont [5/16] 0.0, 128
      %344 = vxpose.xlu0.b32.cont [6/16] 0.0, 128
      %345 = vxpose.xlu0.b32.cont [7/16] 0.0, 128
      %346 = vxpose.xlu0.b32.cont [8/16] 0.0, 128
      %347 = vxpose.xlu0.b32.cont [9/16] 0.0, 128
      %348 = vxpose.xlu0.b32.cont [10/16] 0.0, 128
      %349 = vxpose.xlu0.b32.cont [11/16] 0.0, 128
      %350 = vxpose.xlu0.b32.cont [12/16] 0.0, 128
      %351 = vxpose.xlu0.b32.cont [13/16] 0.0, 128
      %352 = vxpose.xlu0.b32.cont [14/16] 0.0, 128
      %353 = vxpose.xlu0.b32.cont [15/16] 0.0, 128
      %354 = vxpose.xlu0.b32.end [16/16] 0.0, 128
      %v355 = vpop.trf.xlu0
      %v356 = vpop.trf.xlu0
      %v357 = vpop.trf.xlu0
      %v358 = vpop.trf.xlu0
      %v359 = vpop.trf.xlu0
      %v360 = vpop.trf.xlu0
      %v361 = vpop.trf.xlu0
      %v362 = vpop.trf.xlu0
      %v363 = vpop.trf.xlu0
      %v364 = vpop.trf.xlu0
      %v365 = vpop.trf.xlu0
      %v366 = vpop.trf.xlu0
      %v367 = vpop.trf.xlu0
      %v368 = vpop.trf.xlu0
      %v369 = vpop.trf.xlu0
      %v370 = vpop.trf.xlu0
      %vm371 = vcmask 31744
      %v373 = vsel %vm371, %v355, 0
      %vm375 = vcmask 1043456
      %v377 = vsel %vm375, %v338, 0
      %379 = vmatprep.subr.mxu0 0.0
      %380 = vmatpush1.msra.mxu0 %v377
      %381 = vmatprep.subr.mxu0 0.0
      %382 = vmatpush1.msra.mxu0 0.0
      %383 = vmatprep.subr.mxu0 0.0
      %384 = vmatpush1.msra.mxu0 0.0
      %385 = vmatprep.subr.mxu0 0.0
      %386 = vmatpush1.msra.mxu0 0.0
      %387 = vmatprep.subr.mxu0 0.0
      %388 = vmatpush1.msra.mxu0 0.0
      %389 = vmatprep.subr.mxu0 0.0
      %390 = vmatpush1.msra.mxu0 0.0
      %391 = vmatprep.subr.mxu0 0.0
      %392 = vmatpush1.msra.mxu0 0.0
      %393 = vmatprep.subr.mxu0 0.0
      %394 = vmatpush1.msra.mxu0 0.0
      %395 = vmatprep.subr.mxu0 0.0
      %396 = vmatpush1.msra.mxu0 0.0
      %397 = vmatprep.subr.mxu0 0.0
      %398 = vmatpush1.msra.mxu0 0.0
      %399 = vmatprep.subr.mxu0 0.0
      %400 = vmatpush1.msra.mxu0 0.0
      %401 = vmatprep.subr.mxu0 0.0
      %402 = vmatpush1.msra.mxu0 0.0
      %403 = vmatprep.subr.mxu0 0.0
      %404 = vmatpush1.msra.mxu0 0.0
      %405 = vmatprep.subr.mxu0 0.0
      %406 = vmatpush1.msra.mxu0 0.0
      %407 = vmatprep.subr.mxu0 0.0
      %408 = vmatpush1.msra.mxu0 0.0
      %409 = vmatprep.subr.mxu0 0.0
      %410 = vmatpush1.msra.mxu0 0.0
      %411 = vmatprep.subr.mxu0 0.0
      %412 = vmatpush1.msra.mxu0 0.0
      %413 = vmatprep.subr.mxu0 0.0
      %414 = vmatpush1.msra.mxu0 0.0
      %415 = vmatprep.subr.mxu0 0.0
      %416 = vmatpush1.msra.mxu0 0.0
      %417 = vmatprep.subr.mxu0 0.0
      %418 = vmatpush1.msra.mxu0 0.0
      %419 = vmatprep.subr.mxu0 0.0
      %420 = vmatpush1.msra.mxu0 0.0
      %421 = vmatprep.subr.mxu0 0.0
      %422 = vmatpush1.msra.mxu0 0.0
      %423 = vmatprep.subr.mxu0 0.0
      %424 = vmatpush1.msra.mxu0 0.0
      %425 = vmatprep.subr.mxu0 0.0
      %426 = vmatpush1.msra.mxu0 0.0
      %427 = vmatprep.subr.mxu0 0.0
      %428 = vmatpush1.msra.mxu0 0.0
      %429 = vmatprep.subr.mxu0 0.0
      %430 = vmatpush1.msra.mxu0 0.0
      %431 = vmatprep.subr.mxu0 0.0
      %432 = vmatpush1.msra.mxu0 0.0
      %433 = vmatprep.subr.mxu0 0.0
      %434 = vmatpush1.msra.mxu0 0.0
      %435 = vmatprep.subr.mxu0 0.0
      %436 = vmatpush1.msra.mxu0 0.0
      %437 = vmatprep.subr.mxu0 0.0
      %438 = vmatpush1.msra.mxu0 0.0
      %439 = vmatprep.subr.mxu0 0.0
      %440 = vmatpush1.msra.mxu0 0.0
      %441 = vmatprep.subr.mxu0 0.0
      %442 = vmatpush1.msra.mxu0 0.0
      %443 = vmatprep.mubr.f32.mxu0 0.0
      %444 = vmatmul.mubr.f32.gmra.mrb[0].mxu0 %v373
      %v445 = vpop.f32.mrb[0].mxu0
      %v446 = vadd.f32 0.0, %v445
      %v447 = vpop.f32.mrb[0].mxu0
      %448 = vdwg.mxu0
      %v449 = vxor.u32 %v446, 2147483648
      %v450 = vmul.f32 %v449, 1.442695
      %v451 = vpow.pop %v450
      %v452 = vadd.f32 %v451, 1.0
      %v453 = vrcp.pop %v452
      %v454 = vmul.f32 1.0, %v453
      %vm455 = vcmask 253952
      %456 = vst.msk [vmem:[#allocation9] sm:$0x1] %vm455, %v454
      %s457 = scalar_lea.vmem [#allocation2], 32
      %v458 = vld [vmem:[%s457] sm:$0xff]
      %v459 = vld [vmem:[%s457 + $0x8] sm:$0xff]
      %v460 = vld [vmem:[%s457 + $0x10] sm:$0xff]
      %v461 = vld [vmem:[%s457 + $0x18] sm:$0xff]
      %v462 = vmul.f32 %v458, 0.00390625
      %v463 = vmul.f32 %v459, 0.00390625
      %v464 = vmul.f32 %v460, 0.00390625
      %v465 = vmul.f32 %v461, 0.00390625
      %s466 = scalar_lea.vmem [#allocation3], 32
      %v467 = vld [vmem:[%s466] sm:$0xff]
      %v468 = vld [vmem:[%s466 + $0x8] sm:$0xff]
      %v469 = vld [vmem:[%s466 + $0x10] sm:$0xff]
      %v470 = vld [vmem:[%s466 + $0x18] sm:$0xff]
      %v471 = vld [vmem:[#allocation7] sm:$0xf]
      %v473 = vsel %vm191, %v471, 0
      %475 = vmatprep.subr.mxu0 0.0
      %476 = vmatpush1.msra.mxu0 %v462
      %477 = vmatprep.subr.mxu0 0.0
      %478 = vmatpush1.msra.mxu0 %v463
      %479 = vmatprep.subr.mxu0 0.0
      %480 = vmatpush1.msra.mxu0 %v464
      %481 = vmatprep.subr.mxu0 0.0
      %482 = vmatpush1.msra.mxu0 %v465
      %483 = vmatprep.subr.mxu0 0.0
      %484 = vmatpush1.msra.mxu0 0.0
      %485 = vmatprep.subr.mxu0 0.0
      %486 = vmatpush1.msra.mxu0 0.0
      %487 = vmatprep.subr.mxu0 0.0
      %488 = vmatpush1.msra.mxu0 0.0
      %489 = vmatprep.subr.mxu0 0.0
      %490 = vmatpush1.msra.mxu0 0.0
      %491 = vmatprep.subr.mxu0 0.0
      %492 = vmatpush1.msra.mxu0 0.0
      %493 = vmatprep.subr.mxu0 0.0
      %494 = vmatpush1.msra.mxu0 0.0
      %495 = vmatprep.subr.mxu0 0.0
      %496 = vmatpush1.msra.mxu0 0.0
      %497 = vmatprep.subr.mxu0 0.0
      %498 = vmatpush1.msra.mxu0 0.0
      %499 = vmatprep.subr.mxu0 0.0
      %500 = vmatpush1.msra.mxu0 0.0
      %501 = vmatprep.subr.mxu0 0.0
      %502 = vmatpush1.msra.mxu0 0.0
      %503 = vmatprep.subr.mxu0 0.0
      %504 = vmatpush1.msra.mxu0 0.0
      %505 = vmatprep.subr.mxu0 0.0
      %506 = vmatpush1.msra.mxu0 0.0
      %507 = vmatprep.subr.mxu0 0.0
      %508 = vmatpush1.msra.mxu0 0.0
      %509 = vmatprep.subr.mxu0 0.0
      %510 = vmatpush1.msra.mxu0 0.0
      %511 = vmatprep.subr.mxu0 0.0
      %512 = vmatpush1.msra.mxu0 0.0
      %513 = vmatprep.subr.mxu0 0.0
      %514 = vmatpush1.msra.mxu0 0.0
      %515 = vmatprep.subr.mxu0 0.0
      %516 = vmatpush1.msra.mxu0 0.0
      %517 = vmatprep.subr.mxu0 0.0
      %518 = vmatpush1.msra.mxu0 0.0
      %519 = vmatprep.subr.mxu0 0.0
      %520 = vmatpush1.msra.mxu0 0.0
      %521 = vmatprep.subr.mxu0 0.0
      %522 = vmatpush1.msra.mxu0 0.0
      %523 = vmatprep.subr.mxu0 0.0
      %524 = vmatpush1.msra.mxu0 0.0
      %525 = vmatprep.subr.mxu0 0.0
      %526 = vmatpush1.msra.mxu0 0.0
      %527 = vmatprep.subr.mxu0 0.0
      %528 = vmatpush1.msra.mxu0 0.0
      %529 = vmatprep.subr.mxu0 0.0
      %530 = vmatpush1.msra.mxu0 0.0
      %531 = vmatprep.subr.mxu0 0.0
      %532 = vmatpush1.msra.mxu0 0.0
      %533 = vmatprep.subr.mxu0 0.0
      %534 = vmatpush1.msra.mxu0 0.0
      %535 = vmatprep.subr.mxu0 0.0
      %536 = vmatpush1.msra.mxu0 0.0
      %537 = vmatprep.subr.mxu0 0.0
      %538 = vmatpush1.msra.mxu0 0.0
      %539 = vmatprep.mubr.f32.mxu0 0.0
      %540 = vmatmul.mubr.f32.gmra.mrb[0].mxu0 %v473
      %v541 = vpop.f32.mrb[0].mxu0
      %v542 = vadd.f32 0.0, %v541
      %v543 = vpop.f32.mrb[0].mxu0
      %544 = vdwg.mxu0
      %v545 = vmax.f32 %v542, 0.0
      %546 = vmatprep.subr.mxu0 0.0
      %547 = vmatpush1.msra.mxu0 %v467
      %548 = vmatprep.subr.mxu0 0.0
      %549 = vmatpush1.msra.mxu0 %v468
      %550 = vmatprep.subr.mxu0 0.0
      %551 = vmatpush1.msra.mxu0 %v469
      %552 = vmatprep.subr.mxu0 0.0
      %553 = vmatpush1.msra.mxu0 %v470
      %554 = vmatprep.subr.mxu0 0.0
      %555 = vmatpush1.msra.mxu0 0.0
      %556 = vmatprep.subr.mxu0 0.0
      %557 = vmatpush1.msra.mxu0 0.0
      %558 = vmatprep.subr.mxu0 0.0
      %559 = vmatpush1.msra.mxu0 0.0
      %560 = vmatprep.subr.mxu0 0.0
      %561 = vmatpush1.msra.mxu0 0.0
      %562 = vmatprep.subr.mxu0 0.0
      %563 = vmatpush1.msra.mxu0 0.0
      %564 = vmatprep.subr.mxu0 0.0
      %565 = vmatpush1.msra.mxu0 0.0
      %566 = vmatprep.subr.mxu0 0.0
      %567 = vmatpush1.msra.mxu0 0.0
      %568 = vmatprep.subr.mxu0 0.0
      %569 = vmatpush1.msra.mxu0 0.0
      %570 = vmatprep.subr.mxu0 0.0
      %571 = vmatpush1.msra.mxu0 0.0
      %572 = vmatprep.subr.mxu0 0.0
      %573 = vmatpush1.msra.mxu0 0.0
      %574 = vmatprep.subr.mxu0 0.0
      %575 = vmatpush1.msra.mxu0 0.0
      %576 = vmatprep.subr.mxu0 0.0
      %577 = vmatpush1.msra.mxu0 0.0
      %578 = vmatprep.subr.mxu0 0.0
      %579 = vmatpush1.msra.mxu0 0.0
      %580 = vmatprep.subr.mxu0 0.0
      %581 = vmatpush1.msra.mxu0 0.0
      %582 = vmatprep.subr.mxu0 0.0
      %583 = vmatpush1.msra.mxu0 0.0
      %584 = vmatprep.subr.mxu0 0.0
      %585 = vmatpush1.msra.mxu0 0.0
      %586 = vmatprep.subr.mxu0 0.0
      %587 = vmatpush1.msra.mxu0 0.0
      %588 = vmatprep.subr.mxu0 0.0
      %589 = vmatpush1.msra.mxu0 0.0
      %590 = vmatprep.subr.mxu0 0.0
      %591 = vmatpush1.msra.mxu0 0.0
      %592 = vmatprep.subr.mxu0 0.0
      %593 = vmatpush1.msra.mxu0 0.0
      %594 = vmatprep.subr.mxu0 0.0
      %595 = vmatpush1.msra.mxu0 0.0
      %596 = vmatprep.subr.mxu0 0.0
      %597 = vmatpush1.msra.mxu0 0.0
      %598 = vmatprep.subr.mxu0 0.0
      %599 = vmatpush1.msra.mxu0 0.0
      %600 = vmatprep.subr.mxu0 0.0
      %601 = vmatpush1.msra.mxu0 0.0
      %602 = vmatprep.subr.mxu0 0.0
      %603 = vmatpush1.msra.mxu0 0.0
      %604 = vmatprep.subr.mxu0 0.0
      %605 = vmatpush1.msra.mxu0 0.0
      %606 = vmatprep.subr.mxu0 0.0
      %607 = vmatpush1.msra.mxu0 0.0
      %608 = vmatprep.subr.mxu0 0.0
      %609 = vmatpush1.msra.mxu0 0.0
      %610 = vmatprep.mubr.f32.mxu0 0.0
      %611 = vmatmul.mubr.f32.gmra.mrb[0].mxu0 %v473
      %v612 = vpop.f32.mrb[0].mxu0
      %v613 = vadd.f32 0.0, %v612
      %v614 = vpop.f32.mrb[0].mxu0
      %615 = vdwg.mxu0
      %v616 = vmax.f32 %v613, 0.0
      %v617 = vadd.f32 %v545, %v616
      %v618 = vld [vmem:[%s2] sm:$0xf]
      %619 = vxpose.xlu0.b32.start [1/16] %v617, 128
      %620 = vxpose.xlu0.b32.cont [2/16] 0.0, 128
      %621 = vxpose.xlu0.b32.cont [3/16] 0.0, 128
      %622 = vxpose.xlu0.b32.cont [4/16] 0.0, 128
      %623 = vxpose.xlu0.b32.cont [5/16] 0.0, 128
      %624 = vxpose.xlu0.b32.cont [6/16] 0.0, 128
      %625 = vxpose.xlu0.b32.cont [7/16] 0.0, 128
      %626 = vxpose.xlu0.b32.cont [8/16] 0.0, 128
      %627 = vxpose.xlu0.b32.cont [9/16] 0.0, 128
      %628 = vxpose.xlu0.b32.cont [10/16] 0.0, 128
      %629 = vxpose.xlu0.b32.cont [11/16] 0.0, 128
      %630 = vxpose.xlu0.b32.cont [12/16] 0.0, 128
      %631 = vxpose.xlu0.b32.cont [13/16] 0.0, 128
      %632 = vxpose.xlu0.b32.cont [14/16] 0.0, 128
      %633 = vxpose.xlu0.b32.cont [15/16] 0.0, 128
      %634 = vxpose.xlu0.b32.end [16/16] 0.0, 128
      %v635 = vpop.trf.xlu0
      %v636 = vpop.trf.xlu0
      %v637 = vpop.trf.xlu0
      %v638 = vpop.trf.xlu0
      %v639 = vpop.trf.xlu0
      %v640 = vpop.trf.xlu0
      %v641 = vpop.trf.xlu0
      %v642 = vpop.trf.xlu0
      %v643 = vpop.trf.xlu0
      %v644 = vpop.trf.xlu0
      %v645 = vpop.trf.xlu0
      %v646 = vpop.trf.xlu0
      %v647 = vpop.trf.xlu0
      %v648 = vpop.trf.xlu0
      %v649 = vpop.trf.xlu0
      %v650 = vpop.trf.xlu0
      %v652 = vsel %vm371, %v635, 0
      %v655 = vsel %vm375, %v618, 0
      %657 = vmatprep.subr.mxu0 0.0
      %658 = vmatpush1.msra.mxu0 %v655
      %659 = vmatprep.subr.mxu0 0.0
      %660 = vmatpush1.msra.mxu0 0.0
      %661 = vmatprep.subr.mxu0 0.0
      %662 = vmatpush1.msra.mxu0 0.0
      %663 = vmatprep.subr.mxu0 0.0
      %664 = vmatpush1.msra.mxu0 0.0
      %665 = vmatprep.subr.mxu0 0.0
      %666 = vmatpush1.msra.mxu0 0.0
      %667 = vmatprep.subr.mxu0 0.0
      %668 = vmatpush1.msra.mxu0 0.0
      %669 = vmatprep.subr.mxu0 0.0
      %670 = vmatpush1.msra.mxu0 0.0
      %671 = vmatprep.subr.mxu0 0.0
      %672 = vmatpush1.msra.mxu0 0.0
      %673 = vmatprep.subr.mxu0 0.0
      %674 = vmatpush1.msra.mxu0 0.0
      %675 = vmatprep.subr.mxu0 0.0
      %676 = vmatpush1.msra.mxu0 0.0
      %677 = vmatprep.subr.mxu0 0.0
      %678 = vmatpush1.msra.mxu0 0.0
      %679 = vmatprep.subr.mxu0 0.0
      %680 = vmatpush1.msra.mxu0 0.0
      %681 = vmatprep.subr.mxu0 0.0
      %682 = vmatpush1.msra.mxu0 0.0
      %683 = vmatprep.subr.mxu0 0.0
      %684 = vmatpush1.msra.mxu0 0.0
      %685 = vmatprep.subr.mxu0 0.0
      %686 = vmatpush1.msra.mxu0 0.0
      %687 = vmatprep.subr.mxu0 0.0
      %688 = vmatpush1.msra.mxu0 0.0
      %689 = vmatprep.subr.mxu0 0.0
      %690 = vmatpush1.msra.mxu0 0.0
      %691 = vmatprep.subr.mxu0 0.0
      %692 = vmatpush1.msra.mxu0 0.0
      %693 = vmatprep.subr.mxu0 0.0
      %694 = vmatpush1.msra.mxu0 0.0
      %695 = vmatprep.subr.mxu0 0.0
      %696 = vmatpush1.msra.mxu0 0.0
      %697 = vmatprep.subr.mxu0 0.0
      %698 = vmatpush1.msra.mxu0 0.0
      %699 = vmatprep.subr.mxu0 0.0
      %700 = vmatpush1.msra.mxu0 0.0
      %701 = vmatprep.subr.mxu0 0.0
      %702 = vmatpush1.msra.mxu0 0.0
      %703 = vmatprep.subr.mxu0 0.0
      %704 = vmatpush1.msra.mxu0 0.0
      %705 = vmatprep.subr.mxu0 0.0
      %706 = vmatpush1.msra.mxu0 0.0
      %707 = vmatprep.subr.mxu0 0.0
      %708 = vmatpush1.msra.mxu0 0.0
      %709 = vmatprep.subr.mxu0 0.0
      %710 = vmatpush1.msra.mxu0 0.0
      %711 = vmatprep.subr.mxu0 0.0
      %712 = vmatpush1.msra.mxu0 0.0
      %713 = vmatprep.subr.mxu0 0.0
      %714 = vmatpush1.msra.mxu0 0.0
      %715 = vmatprep.subr.mxu0 0.0
      %716 = vmatpush1.msra.mxu0 0.0
      %717 = vmatprep.subr.mxu0 0.0
      %718 = vmatpush1.msra.mxu0 0.0
      %719 = vmatprep.subr.mxu0 0.0
      %720 = vmatpush1.msra.mxu0 0.0
      %721 = vmatprep.mubr.f32.mxu0 0.0
      %722 = vmatmul.mubr.f32.gmra.mrb[0].mxu0 %v652
      %v723 = vpop.f32.mrb[0].mxu0
      %v724 = vadd.f32 0.0, %v723
      %v725 = vpop.f32.mrb[0].mxu0
      %726 = vdwg.mxu0
      %v727 = vxor.u32 %v724, 2147483648
      %v728 = vmul.f32 %v727, 1.442695
      %v729 = vpow.pop %v728
      %v730 = vadd.f32 %v729, 1.0
      %v731 = vrcp.pop %v730
      %v732 = vmul.f32 1.0, %v731
      %733 = vst.msk [vmem:[#allocation9 + $0x1] sm:$0x1] %vm455, %v732
    $region29: #{tpu_custom_call.1} parent=1 // pred_fallthru
      _
    // Predicated region
    $region30: #{tpu_custom_call.1} parent=1 // pred_check
      _
    $region31: #{tpu_custom_call.1} parent=1 // pred_check_branch
      %735 = sbr.rel (0) target = $region33
    $region32: #{tpu_custom_call.1} parent=1 // pred_region
      %s737 = ssub.s32 32, 32
      %738 = vsyncadd [#allocation6], %s737
      %s740 = sshll.u32 [#allocation9], 4
      %s741 = int_to_ptr.vmem [resolvable:$true] %s740
      %743 = dma.vmem_to_hbm [thread:$0]  %s741, 32, %s3, [#allocation6]
    $region33: #{tpu_custom_call.1} parent=1 // pred_fallthru
      _
    // Predicated region
    $region34: #{tpu_custom_call.1} parent=1 // pred_check
      _
    $region35: #{tpu_custom_call.1} parent=1 // pred_check_branch
      %745 = sbr.rel (0) target = $region37
    $region36: #{tpu_custom_call.1} parent=1 // pred_region
      %746 = dma.done [#allocation6], 32
    $region37: #{tpu_custom_call.1} parent=1 // pred_fallthru
      _
    %747 = vsyncpa [#allocation5], 1
    %748 = vsyncpa [#allocation8], 1
    %749 = vsyncpa [#allocation6], 1

</llo_original>
